<compile_context>
chip_gen: v5e
topology: v5e:2x2
jax: 0.10.0
libtpu: 0.0.40
codegen_flags: <defaults>
</compile_context>

<pallas_src>
import functools

import jax
import jax.numpy as jnp
from jax import lax
from jax.experimental import pallas as pl
from jax.experimental.pallas import tpu as pltpu


def _pseudo_label_kernel(x_ref, label_ref, ce_part_ref, cnt_part_ref, *,
                         conf_thr, smooth_thr, num_cls, tile_voxels, n_valid,
                         needs_valid_mask):
    # x: (C, TR, 128) logits for TR*128 voxels; upcast in-VMEM so a bf16
    # producer keeps the HBM stream at half width.
    x = x_ref[...].astype(jnp.float32)
    TR = x.shape[1]

    # --- class-axis max/min + first-occurrence argmax (matches torch.max) ---
    xmax = jnp.max(x, axis=0)                                    # (TR, 128)
    xmin = jnp.min(x, axis=0)                                    # (TR, 128)
    iota = lax.broadcasted_iota(jnp.int32, x.shape, dimension=0)
    idx = jnp.min(jnp.where(x == xmax, iota, num_cls), axis=0)   # (TR, 128) i32

    # --- confidence mask & smooth mask (k=1 pooling -> max|x| = max(xmax,-xmin))
    conf_mask = xmax >= conf_thr
    smoo_mask = jnp.maximum(xmax, -xmin) >= smooth_thr
    # TODO(synk): kernel_size > 1 would need a real avg_pool3d over the 5-D
    # tensor (as PyTorch does); only the default kernel_size=1 is implemented.
    sel = jnp.logical_and(conf_mask, smoo_mask)                  # (TR, 128)

    if needs_valid_mask:
        # Mask off the zero-padded tail voxels so the partial sums stay exact.
        row = lax.broadcasted_iota(jnp.int32, (TR, 128), 0)
        lane = lax.broadcasted_iota(jnp.int32, (TR, 128), 1)
        gpos = pl.program_id(0) * tile_voxels + row * 128 + lane
        sel = jnp.logical_and(sel, gpos < n_valid)

    # --- softmax + masked cross-entropy --------------------------------------
    ex = jnp.exp(x - xmax)                                       # (C, TR, 128)
    inv_sum = pl.reciprocal(jnp.sum(ex, axis=0))  # == max_c occ_score == occ_score[argmax]
    # CE(occ_score, argmax) = logsumexp(occ_score) - occ_score[argmax]
    #                       = log(sum_c exp(occ_score_c - max_prob))
    # with occ_score_c = ex_c * inv_sum  ->  exp((ex_c - 1) * inv_sum)
    ce = jnp.log(jnp.sum(jnp.exp((ex - 1.0) * inv_sum), axis=0))  # (TR, 128)

    # --- lane-dense outputs ---------------------------------------------------
    label_ref[...] = jnp.where(sel, idx, -1)

    # Per-tile partial reductions (keeps the per-voxel CE array off HBM).
    masked_ce = jnp.where(sel, ce, 0.0)
    ce_part_ref[...] = masked_ce.reshape(TR // 8, 8, 128).sum(axis=0,
                                                              keepdims=True)
    cnt_part_ref[...] = sel.astype(jnp.float32).reshape(TR // 8, 8, 128).sum(
        axis=0, keepdims=True)


def pseudo_label_selector(occ_pred,
                          conf_lower_threshold=0.7,
                          smooth_lower_threshold=0.7,
                          kernel_size=1,
                          tile_voxels=16384):
    """Returns (pseudo_mask, conf_pseudo_labels, loss) like the PyTorch forward."""
    assert kernel_size == 1, "only the default kernel_size=1 is implemented"
    B, Dx, Dy, Dz, C = occ_pred.shape
    N = B * Dx * Dy * Dz

    # Tile size: multiple of 1024 voxels (so output blocks are (8k, 128)),
    # clamped for small inputs so we don't process a mountain of padding.
    n_rounded = ((N + 1023) // 1024) * 1024
    TN = max(1024, (int(min(tile_voxels, n_rounded)) // 1024) * 1024)
    num_tiles = pl.cdiv(N, TN)
    NP = num_tiles * TN
    TR = TN // 128
    R = NP // 128

    # Put voxels on the TPU lane axis: (B,Dx,Dy,Dz,C) -> (C, N) -> (C, R, 128).
    # (Transpose/pad/reshape fuse into one XLA copy; a bf16 producer stays
    #  bf16 through HBM and is upcast inside the kernel.)
    x = jnp.transpose(occ_pred.reshape(N, C), (1, 0))
    if NP != N:
        x = jnp.pad(x, ((0, 0), (0, NP - N)))
    x = x.reshape(C, R, 128)

    kernel = functools.partial(_pseudo_label_kernel,
                               conf_thr=float(conf_lower_threshold),
                               smooth_thr=float(smooth_lower_threshold),
                               num_cls=C,
                               tile_voxels=TN,
                               n_valid=N,
                               needs_valid_mask=(NP != N))

    labels2d, ce_part, cnt_part = pl.pallas_call(
        kernel,
        grid=(num_tiles,),
        in_specs=[pl.BlockSpec((C, TR, 128), lambda i: (0, i, 0))],
        out_specs=[
            pl.BlockSpec((TR, 128), lambda i: (i, 0)),     # labels (-1 fill)
            pl.BlockSpec((1, 8, 128), lambda i: (i, 0, 0)),  # CE partial sums
            pl.BlockSpec((1, 8, 128), lambda i: (i, 0, 0)),  # count partials
        ],
        out_shape=[
            jax.ShapeDtypeStruct((R, 128), jnp.int32),
            jax.ShapeDtypeStruct((num_tiles, 8, 128), jnp.float32),
            jax.ShapeDtypeStruct((num_tiles, 8, 128), jnp.float32),
        ],
        compiler_params=pltpu.CompilerParams(
            dimension_semantics=("parallel",),
            vmem_limit_bytes=64 << 20),
    )(x)

    labels_flat = labels2d.reshape(NP)[:N]
    pmask_flat = labels_flat >= 0            # mask <=> label != -1

    # Matches F.cross_entropy 'mean' on the gathered rows (NaN if nothing
    # passes both thresholds, same as PyTorch on an empty gather).
    loss = jnp.sum(ce_part) / jnp.sum(cnt_part)

    return (pmask_flat.reshape(B, Dx, Dy, Dz),
            labels_flat.reshape(B, Dx, Dy, Dz),
            loss)


def _reference(occ_pred, conf_thr=0.7, smooth_thr=0.7):
    B, Dx, Dy, Dz, C = occ_pred.shape
    x = occ_pred.reshape(-1, C).astype(jnp.float32)
    occ_score = jax.nn.softmax(x, axis=-1)
    max_val = jnp.max(x, axis=-1)
    idx = jnp.argmax(x, axis=-1).astype(jnp.int32)
    conf_mask = max_val >= conf_thr
    smoo_mask = jnp.max(jnp.abs(x), axis=-1) >= smooth_thr
    pmask = conf_mask & smoo_mask
    labels = jnp.where(pmask, idx, -1)
    lse = jax.scipy.special.logsumexp(occ_score, axis=-1)
    picked = jnp.take_along_axis(occ_score, idx[:, None], axis=-1)[:, 0]
    ce = lse - picked
    loss = jnp.sum(jnp.where(pmask, ce, 0.0)) / jnp.sum(pmask)
    return (pmask.reshape(B, Dx, Dy, Dz),
            labels.reshape(B, Dx, Dy, Dz),
            loss)


if __name__ == "__main__":
    key = jax.random.PRNGKey(0)
    B, Dx, Dy, Dz, C = 2, 8, 8, 4, 16          # N = 512 voxels, 16 classes
    # scale so that conf/smooth masks come out mixed (not all-True/all-False)
    occ_pred = 0.6 * jax.random.normal(key, (B, Dx, Dy, Dz, C), dtype=jnp.float32)

    pseudo_mask, conf_pseudo_labels, loss = pseudo_label_selector(occ_pred)
    jax.block_until_ready((pseudo_mask, conf_pseudo_labels, loss))

    ref_mask, ref_labels, ref_loss = _reference(occ_pred)
    assert pseudo_mask.shape == (B, Dx, Dy, Dz)
    assert conf_pseudo_labels.shape == (B, Dx, Dy, Dz)
    assert bool(jnp.all(pseudo_mask == ref_mask))
    assert bool(jnp.all(conf_pseudo_labels == ref_labels))
    assert bool(jnp.allclose(loss, ref_loss, rtol=1e-5, atol=1e-5))

    print("KERNEL_OK")
</pallas_src>

<mosaic_0001>
module attributes {stable_mosaic.version = 11 : i64} {
  func.func @_pseudo_label_kernel(%arg0: i32, %arg1: memref<16x8x128xf32, #tpu.memory_space<vmem>>, %arg2: memref<8x128xi32, #tpu.memory_space<vmem>>, %arg3: memref<1x8x128xf32, #tpu.memory_space<vmem>>, %arg4: memref<1x8x128xf32, #tpu.memory_space<vmem>>) attributes {dimension_semantics = [#tpu.dimension_semantics<parallel>], iteration_bounds = array<i64: 1>, scalar_prefetch = 0 : i64, scratch_operands = 0 : i64, tpu.core_type = #tpu.core_type<tc>, window_params = [{transform_indices = @transform_0, window_bounds = array<i64: 16, 8, 128>}, {transform_indices = @transform_1, window_bounds = array<i64: 8, 128>}, {transform_indices = @transform_2, window_bounds = array<i64: 1, 8, 128>}, {transform_indices = @transform_3, window_bounds = array<i64: 1, 8, 128>}]} {
    %c0 = arith.constant 0 : index
    %c0_0 = arith.constant 0 : index
    %c0_1 = arith.constant 0 : index
    %0 = vector.load %arg1[%c0, %c0_0, %c0_1] : memref<16x8x128xf32, #tpu.memory_space<vmem>>, vector<16x8x128xf32>
    %cst = arith.constant dense<0xFF800000> : vector<8x128xf32>
    %1 = vector.multi_reduction <maximumf>, %0, %cst [0] : vector<16x8x128xf32> to vector<8x128xf32>
    %cst_2 = arith.constant dense<0x7F800000> : vector<8x128xf32>
    %2 = vector.multi_reduction <minimumf>, %0, %cst_2 [0] : vector<16x8x128xf32> to vector<8x128xf32>
    %3 = tpu.iota {dimensions = array<i32: 0>} : vector<16x8x128xi32>
    %4 = vector.shape_cast %1 : vector<8x128xf32> to vector<1x8x128xf32>
    %5 = vector.broadcast %4 : vector<1x8x128xf32> to vector<16x8x128xf32>
    %6 = arith.cmpf oeq, %0, %5 : vector<16x8x128xf32>
    %c16_i32 = arith.constant 16 : i32
    %7 = vector.broadcast %c16_i32 : i32 to vector<16x8x128xi32>
    %8 = arith.select %6, %3, %7 : vector<16x8x128xi1>, vector<16x8x128xi32>
    %cst_3 = arith.constant dense<2147483647> : vector<8x128xi32>
    %9 = vector.multi_reduction <minsi>, %8, %cst_3 [0] : vector<16x8x128xi32> to vector<8x128xi32>
    %cst_4 = arith.constant 0.699999988 : f32
    %10 = vector.broadcast %cst_4 : f32 to vector<8x128xf32>
    %11 = arith.cmpf oge, %1, %10 : vector<8x128xf32>
    %cst_5 = arith.constant 0.000000e+00 : f32
    %12 = vector.broadcast %cst_5 : f32 to vector<8x128xf32>
    %13 = arith.subf %12, %2 : vector<8x128xf32>
    %14 = arith.maximumf %1, %13 : vector<8x128xf32>
    %cst_6 = arith.constant 0.699999988 : f32
    %15 = vector.broadcast %cst_6 : f32 to vector<8x128xf32>
    %16 = arith.cmpf oge, %14, %15 : vector<8x128xf32>
    %17 = arith.andi %11, %16 : vector<8x128xi1>
    %18 = tpu.iota {dimensions = array<i32: 0>} : vector<8x128xi32>
    %19 = tpu.iota {dimensions = array<i32: 1>} : vector<8x128xi32>
    %c1024_i32 = arith.constant 1024 : i32
    %20 = arith.muli %arg0, %c1024_i32 : i32
    %c128_i32 = arith.constant 128 : i32
    %21 = vector.broadcast %c128_i32 : i32 to vector<8x128xi32>
    %22 = arith.muli %18, %21 : vector<8x128xi32>
    %23 = vector.broadcast %20 : i32 to vector<8x128xi32>
    %24 = arith.addi %23, %22 : vector<8x128xi32>
    %25 = arith.addi %24, %19 : vector<8x128xi32>
    %c512_i32 = arith.constant 512 : i32
    %26 = vector.broadcast %c512_i32 : i32 to vector<8x128xi32>
    %27 = arith.cmpi slt, %25, %26 : vector<8x128xi32>
    %28 = arith.andi %17, %27 : vector<8x128xi1>
    %29 = vector.shape_cast %1 : vector<8x128xf32> to vector<1x8x128xf32>
    %30 = vector.broadcast %29 : vector<1x8x128xf32> to vector<16x8x128xf32>
    %31 = arith.subf %0, %30 : vector<16x8x128xf32>
    %32 = math.exp %31 : vector<16x8x128xf32>
    %cst_7 = arith.constant dense<0.000000e+00> : vector<8x128xf32>
    %33 = vector.multi_reduction <add>, %32, %cst_7 [0] : vector<16x8x128xf32> to vector<8x128xf32>
    %34 = tpu.reciprocal %33 : vector<8x128xf32> -> vector<8x128xf32>
    %cst_8 = arith.constant 1.000000e+00 : f32
    %35 = vector.broadcast %cst_8 : f32 to vector<16x8x128xf32>
    %36 = arith.subf %32, %35 : vector<16x8x128xf32>
    %37 = vector.shape_cast %34 : vector<8x128xf32> to vector<1x8x128xf32>
    %38 = vector.broadcast %37 : vector<1x8x128xf32> to vector<16x8x128xf32>
    %39 = arith.mulf %36, %38 : vector<16x8x128xf32>
    %40 = math.exp %39 : vector<16x8x128xf32>
    %cst_9 = arith.constant dense<0.000000e+00> : vector<8x128xf32>
    %41 = vector.multi_reduction <add>, %40, %cst_9 [0] : vector<16x8x128xf32> to vector<8x128xf32>
    %42 = math.log %41 : vector<8x128xf32>
    %c-1_i32 = arith.constant -1 : i32
    %43 = vector.broadcast %c-1_i32 : i32 to vector<8x128xi32>
    %44 = arith.select %28, %9, %43 : vector<8x128xi1>, vector<8x128xi32>
    %c0_10 = arith.constant 0 : index
    %c0_11 = arith.constant 0 : index
    %45 = vector.load %arg2[%c0_10, %c0_11] : memref<8x128xi32, #tpu.memory_space<vmem>>, vector<8x128xi32>
    tpu.vector_store %arg2[%c0_10, %c0_11], %44 {strides = array<i32>} : memref<8x128xi32, #tpu.memory_space<vmem>>, vector<8x128xi32>,
    %cst_12 = arith.constant 0.000000e+00 : f32
    %46 = vector.broadcast %cst_12 : f32 to vector<8x128xf32>
    %47 = arith.select %28, %42, %46 : vector<8x128xi1>, vector<8x128xf32>
    %48 = vector.shape_cast %47 : vector<8x128xf32> to vector<1x8x128xf32>
    %cst_13 = arith.constant dense<0.000000e+00> : vector<8x128xf32>
    %49 = vector.multi_reduction <add>, %48, %cst_13 [0] : vector<1x8x128xf32> to vector<8x128xf32>
    %50 = vector.shape_cast %49 : vector<8x128xf32> to vector<1x8x128xf32>
    %c0_14 = arith.constant 0 : index
    %c0_15 = arith.constant 0 : index
    %c0_16 = arith.constant 0 : index
    %51 = vector.load %arg3[%c0_14, %c0_15, %c0_16] : memref<1x8x128xf32, #tpu.memory_space<vmem>>, vector<1x8x128xf32>
    tpu.vector_store %arg3[%c0_14, %c0_15, %c0_16], %50 {strides = array<i32>} : memref<1x8x128xf32, #tpu.memory_space<vmem>>, vector<1x8x128xf32>,
    %52 = arith.extui %28 : vector<8x128xi1> to vector<8x128xi32>
    %53 = arith.sitofp %52 : vector<8x128xi32> to vector<8x128xf32>
    %54 = vector.shape_cast %53 : vector<8x128xf32> to vector<1x8x128xf32>
    %cst_17 = arith.constant dense<0.000000e+00> : vector<8x128xf32>
    %55 = vector.multi_reduction <add>, %54, %cst_17 [0] : vector<1x8x128xf32> to vector<8x128xf32>
    %56 = vector.shape_cast %55 : vector<8x128xf32> to vector<1x8x128xf32>
    %c0_18 = arith.constant 0 : index
    %c0_19 = arith.constant 0 : index
    %c0_20 = arith.constant 0 : index
    %57 = vector.load %arg4[%c0_18, %c0_19, %c0_20] : memref<1x8x128xf32, #tpu.memory_space<vmem>>, vector<1x8x128xf32>
    tpu.vector_store %arg4[%c0_18, %c0_19, %c0_20], %56 {strides = array<i32>} : memref<1x8x128xf32, #tpu.memory_space<vmem>>, vector<1x8x128xf32>,
    return
  }
  func.func @transform_0(%arg0: i32) -> (i32, i32, i32) {
    %c0_i32 = arith.constant 0 : i32
    %c0_i32_0 = arith.constant 0 : i32
    %c0_i32_1 = arith.constant 0 : i32
    return %c0_i32, %arg0, %c0_i32_0 : i32, i32, i32
  }
  func.func @transform_1(%arg0: i32) -> (i32, i32) {
    %c0_i32 = arith.constant 0 : i32
    %c0_i32_0 = arith.constant 0 : i32
    return %arg0, %c0_i32 : i32, i32
  }
  func.func @transform_2(%arg0: i32) -> (i32, i32, i32) {
    %c0_i32 = arith.constant 0 : i32
    %c0_i32_0 = arith.constant 0 : i32
    %c0_i32_1 = arith.constant 0 : i32
    return %arg0, %c0_i32, %c0_i32_0 : i32, i32, i32
  }
  func.func @transform_3(%arg0: i32) -> (i32, i32, i32) {
    %c0_i32 = arith.constant 0 : i32
    %c0_i32_0 = arith.constant 0 : i32
    %c0_i32_1 = arith.constant 0 : i32
    return %arg0, %c0_i32, %c0_i32_0 : i32, i32, i32
  }
}

</mosaic_0001>

<llo_original>
// kernel: tpu_custom_call.1
$region0: #{tpu_custom_call.1}
  #allocation0 [shape = 'u32[]', space=smem, size = 0x4, offset = 0x4, fixed_abs, tag = 'smem constant byte address 0x4 - core index']
  #allocation1 [shape = 'u32[72,128]{1,0:T(1,128)}', space=vmem, size = 0x9000, scoped, tag = 'internal scratch']
  %s0 = inlined_call_operand.hbm [shape: f32[16,8,128], index: 0, kind: input, shape index: {}]
  %s1 = inlined_call_operand.hbm [shape: s32[8,128], index: 1, kind: output, shape index: {0}]
  %s2 = inlined_call_operand.hbm [shape: f32[1,8,128], index: 2, kind: output, shape index: {1}]
  %s3 = inlined_call_operand.hbm [shape: f32[1,8,128], index: 3, kind: output, shape index: {2}]
  %4 = xla_tuple %s1, %s2, %s3
  %s5 = sld [smem:[#allocation0]]
  $region34: #{tpu_custom_call.1} parent=0
    _
  %s7 = ssub.s32 1, %s5
  %s8 = scalar_select 0, %s7, %s5
  $region1: #{tpu_custom_call.1} parent=0
    #allocation2 [shape = 'u8[65536]{0}', space=vmem, size = 0x10000, scoped, tag = 'input window, operand 0, single buffered']
    #allocation3 [shape = 's32[1]{0}', space=sflag, size = 0x4, scoped, tag = 'scoped memory for tpu_custom_call.1']
    #allocation4 [shape = 's32[1]{0}', space=sflag, size = 0x4, scoped, tag = 'scoped memory for tpu_custom_call.1']
    #allocation5 [shape = 'u8[4096]{0}', space=vmem, size = 0x1000, scoped, tag = 'output window, operand 0, single buffered']
    #allocation6 [shape = 'u8[4096]{0}', space=vmem, size = 0x1000, scoped, tag = 'output window, operand 1, single buffered']
    #allocation7 [shape = 's32[1]{0}', space=sflag, size = 0x4, scoped, tag = 'scoped memory for tpu_custom_call.1']
    #allocation8 [shape = 'u8[4096]{0}', space=vmem, size = 0x1000, scoped, tag = 'output window, operand 2, single buffered']
    %9 = vsyncpa [#allocation3], 0
    %10 = vsyncpa [#allocation4], 0
    %11 = vsyncpa [#allocation7], 0
    // Predicated region
    $region2: #{tpu_custom_call.1} parent=1 // pred_check
      _
    $region3: #{tpu_custom_call.1} parent=1 // pred_check_branch
      %13 = sbr.rel (0) target = $region5
    $region4: #{tpu_custom_call.1} parent=1 // pred_region
      %15 = vsyncadd [#allocation3], 0
      %s16 = sshll.u32 %s0, 4
      %s17 = int_to_ptr.hbm [resolvable:$true] %s16
      %s18 = sshll.u32 [#allocation2], 4
      %s19 = int_to_ptr.vmem [resolvable:$true] %s18
      %24 = dma.hbm_to_vmem [thread:$0]  %s17, 2048, %s19, [#allocation3], 128, 128, 8
    $region5: #{tpu_custom_call.1} parent=1 // pred_fallthru
      _
    // Predicated region
    $region6: #{tpu_custom_call.1} parent=1 // pred_check
      _
    $region7: #{tpu_custom_call.1} parent=1 // pred_check_branch
      %26 = sbr.rel (0) target = $region9
    $region8: #{tpu_custom_call.1} parent=1 // pred_region
      %28 = dma.done [#allocation3], 2048
    $region9: #{tpu_custom_call.1} parent=1 // pred_fallthru
      _
    %v29 = vld [vmem:[#allocation2] sm:$0xff]
    %v30 = vld [vmem:[#allocation2 + $0x8] sm:$0xff]
    %v31 = vld [vmem:[#allocation2 + $0x10] sm:$0xff]
    %v32 = vld [vmem:[#allocation2 + $0x18] sm:$0xff]
    %v33 = vld [vmem:[#allocation2 + $0x20] sm:$0xff]
    %v34 = vld [vmem:[#allocation2 + $0x28] sm:$0xff]
    %v35 = vld [vmem:[#allocation2 + $0x30] sm:$0xff]
    %v36 = vld [vmem:[#allocation2 + $0x38] sm:$0xff]
    %v37 = vld [vmem:[#allocation2 + $0x40] sm:$0xff]
    %v38 = vld [vmem:[#allocation2 + $0x48] sm:$0xff]
    %v39 = vld [vmem:[#allocation2 + $0x50] sm:$0xff]
    %v40 = vld [vmem:[#allocation2 + $0x58] sm:$0xff]
    %v41 = vld [vmem:[#allocation2 + $0x60] sm:$0xff]
    %v42 = vld [vmem:[#allocation2 + $0x68] sm:$0xff]
    %v43 = vld [vmem:[#allocation2 + $0x70] sm:$0xff]
    %v44 = vld [vmem:[#allocation2 + $0x78] sm:$0xff]
    %v45 = vmax.f32 %v29, %v33
    %v46 = vmax.f32 %v30, %v34
    %v47 = vmax.f32 %v31, %v35
    %v48 = vmax.f32 %v32, %v36
    %v49 = vmax.f32 %v45, %v37
    %v50 = vmax.f32 %v46, %v38
    %v51 = vmax.f32 %v47, %v39
    %v52 = vmax.f32 %v48, %v40
    %v53 = vmax.f32 %v49, %v41
    %v54 = vmax.f32 %v50, %v42
    %v55 = vmax.f32 %v51, %v43
    %v56 = vmax.f32 %v52, %v44
    %v57 = vmax.f32 %v53, %v54
    %v58 = vmax.f32 %v55, %v56
    %v59 = vmax.f32 %v57, %v58
    %v60 = vmin.f32 %v29, %v33
    %v61 = vmin.f32 %v30, %v34
    %v62 = vmin.f32 %v31, %v35
    %v63 = vmin.f32 %v32, %v36
    %v64 = vmin.f32 %v60, %v37
    %v65 = vmin.f32 %v61, %v38
    %v66 = vmin.f32 %v62, %v39
    %v67 = vmin.f32 %v63, %v40
    %v68 = vmin.f32 %v64, %v41
    %v69 = vmin.f32 %v65, %v42
    %v70 = vmin.f32 %v66, %v43
    %v71 = vmin.f32 %v67, %v44
    %v72 = vmin.f32 %v68, %v69
    %v73 = vmin.f32 %v70, %v71
    %v74 = vmin.f32 %v72, %v73
    %vm75 = vcmp.eq.f32.partialorder %v29, %v59
    %vm76 = vcmp.eq.f32.partialorder %v30, %v59
    %vm77 = vcmp.eq.f32.partialorder %v31, %v59
    %vm78 = vcmp.eq.f32.partialorder %v32, %v59
    %vm79 = vcmp.eq.f32.partialorder %v33, %v59
    %vm80 = vcmp.eq.f32.partialorder %v34, %v59
    %vm81 = vcmp.eq.f32.partialorder %v35, %v59
    %vm82 = vcmp.eq.f32.partialorder %v36, %v59
    %vm83 = vcmp.eq.f32.partialorder %v37, %v59
    %vm84 = vcmp.eq.f32.partialorder %v38, %v59
    %vm85 = vcmp.eq.f32.partialorder %v39, %v59
    %vm86 = vcmp.eq.f32.partialorder %v40, %v59
    %vm87 = vcmp.eq.f32.partialorder %v41, %v59
    %vm88 = vcmp.eq.f32.partialorder %v42, %v59
    %vm89 = vcmp.eq.f32.partialorder %v43, %v59
    %vm90 = vcmp.eq.f32.partialorder %v44, %v59
    %v91 = vsel %vm75, 0, 16
    %v92 = vsel %vm76, 1, 16
    %v93 = vsel %vm77, 2, 16
    %v94 = vsel %vm78, 3, 16
    %v95 = vsel %vm79, 4, 16
    %v96 = vsel %vm80, 5, 16
    %v97 = vsel %vm81, 6, 16
    %v98 = vsel %vm82, 7, 16
    %v99 = vsel %vm83, 8, 16
    %v100 = vsel %vm84, 9, 16
    %v101 = vsel %vm85, 10, 16
    %v102 = vsel %vm86, 11, 16
    %v103 = vsel %vm87, 12, 16
    %v104 = vsel %vm88, 13, 16
    %v105 = vsel %vm89, 14, 16
    %v106 = vsel %vm90, 15, 16
    %vm107 = vcmp.lt.s32.totalorder %v91, %v95
    %v108 = vsel %vm107, %v91, %v95
    %vm109 = vcmp.lt.s32.totalorder %v92, %v96
    %v110 = vsel %vm109, %v92, %v96
    %vm111 = vcmp.lt.s32.totalorder %v93, %v97
    %v112 = vsel %vm111, %v93, %v97
    %vm113 = vcmp.lt.s32.totalorder %v94, %v98
    %v114 = vsel %vm113, %v94, %v98
    %vm115 = vcmp.lt.s32.totalorder %v108, %v99
    %v116 = vsel %vm115, %v108, %v99
    %vm117 = vcmp.lt.s32.totalorder %v110, %v100
    %v118 = vsel %vm117, %v110, %v100
    %vm119 = vcmp.lt.s32.totalorder %v112, %v101
    %v120 = vsel %vm119, %v112, %v101
    %vm121 = vcmp.lt.s32.totalorder %v114, %v102
    %v122 = vsel %vm121, %v114, %v102
    %vm123 = vcmp.lt.s32.totalorder %v116, %v103
    %v124 = vsel %vm123, %v116, %v103
    %vm125 = vcmp.lt.s32.totalorder %v118, %v104
    %v126 = vsel %vm125, %v118, %v104
    %vm127 = vcmp.lt.s32.totalorder %v120, %v105
    %v128 = vsel %vm127, %v120, %v105
    %vm129 = vcmp.lt.s32.totalorder %v122, %v106
    %v130 = vsel %vm129, %v122, %v106
    %vm131 = vcmp.lt.s32.totalorder %v124, %v126
    %v132 = vsel %vm131, %v124, %v126
    %vm133 = vcmp.lt.s32.totalorder %v128, %v130
    %v134 = vsel %vm133, %v128, %v130
    %vm135 = vcmp.lt.s32.totalorder %v132, %v134
    %v136 = vsel %vm135, %v132, %v134
    %vm137 = vcmp.ge.f32.partialorder %v59, 0.7
    %v138 = vsub.f32 0.0, %v74
    %v139 = vmax.f32 %v59, %v138
    %vm140 = vcmp.ge.f32.partialorder %v139, 0.7
    %vm141 = vmand %vm137, %vm140
    %v142 = vlaneseq
    %v143 = vshrl.u32 %v142, 7
    %v144 = vlaneseq
    %v145 = vand.u32 %v144, 127
    %s146 = smul.u32 0, 1024
    %v147 = vmul.u32 %v143, 128
    %v148 = vstv %s146
    %v149 = vadd.s32 %v148, %v147
    %v150 = vadd.s32 %v149, %v145
    %vm151 = vcmp.lt.s32.totalorder %v150, 512
    %vm152 = vmand %vm141, %vm151
    %v153 = vsub.f32 %v29, %v59
    %v154 = vsub.f32 %v30, %v59
    %v155 = vsub.f32 %v31, %v59
    %v156 = vsub.f32 %v32, %v59
    %v157 = vsub.f32 %v33, %v59
    %v158 = vsub.f32 %v34, %v59
    %v159 = vsub.f32 %v35, %v59
    %v160 = vsub.f32 %v36, %v59
    %v161 = vsub.f32 %v37, %v59
    %v162 = vsub.f32 %v38, %v59
    %v163 = vsub.f32 %v39, %v59
    %v164 = vsub.f32 %v40, %v59
    %v165 = vsub.f32 %v41, %v59
    %v166 = vsub.f32 %v42, %v59
    %v167 = vsub.f32 %v43, %v59
    %v168 = vsub.f32 %v44, %v59
    %v169 = vmul.f32 %v153, 1.442695
    %v170 = vpow.pop %v169
    %v171 = vmul.f32 %v154, 1.442695
    %v172 = vpow.pop %v171
    %v173 = vmul.f32 %v155, 1.442695
    %v174 = vpow.pop %v173
    %v175 = vmul.f32 %v156, 1.442695
    %v176 = vpow.pop %v175
    %v177 = vmul.f32 %v157, 1.442695
    %v178 = vpow.pop %v177
    %v179 = vmul.f32 %v158, 1.442695
    %v180 = vpow.pop %v179
    %v181 = vmul.f32 %v159, 1.442695
    %v182 = vpow.pop %v181
    %v183 = vmul.f32 %v160, 1.442695
    %v184 = vpow.pop %v183
    %v185 = vmul.f32 %v161, 1.442695
    %v186 = vpow.pop %v185
    %v187 = vmul.f32 %v162, 1.442695
    %v188 = vpow.pop %v187
    %v189 = vmul.f32 %v163, 1.442695
    %v190 = vpow.pop %v189
    %v191 = vmul.f32 %v164, 1.442695
    %v192 = vpow.pop %v191
    %v193 = vmul.f32 %v165, 1.442695
    %v194 = vpow.pop %v193
    %v195 = vmul.f32 %v166, 1.442695
    %v196 = vpow.pop %v195
    %v197 = vmul.f32 %v167, 1.442695
    %v198 = vpow.pop %v197
    %v199 = vmul.f32 %v168, 1.442695
    %v200 = vpow.pop %v199
    %v201 = vadd.f32 %v170, %v172
    %v202 = vadd.f32 %v201, %v174
    %v203 = vadd.f32 %v202, %v176
    %v204 = vadd.f32 %v203, %v178
    %v205 = vadd.f32 %v204, %v180
    %v206 = vadd.f32 %v205, %v182
    %v207 = vadd.f32 %v206, %v184
    %v208 = vadd.f32 %v207, %v186
    %v209 = vadd.f32 %v208, %v188
    %v210 = vadd.f32 %v209, %v190
    %v211 = vadd.f32 %v210, %v192
    %v212 = vadd.f32 %v211, %v194
    %v213 = vadd.f32 %v212, %v196
    %v214 = vadd.f32 %v213, %v198
    %v215 = vadd.f32 %v214, %v200
    %v216 = vrcp.pop %v215
    %v217 = vmul.f32 %v215, %v216
    %v218 = vsub.f32 1.0, %v217
    %v219 = vmul.f32 %v216, %v218
    %v220 = vadd.f32 %v216, %v219
    %vm221 = vweird.f32 %v215
    %vm222 = vweird.f32 %v216
    %vm223 = vmor %vm221, %vm222
    %v224 = vsel %vm223, %v216, %v220
    %v225 = vand.u32 2147483647, %v215
    %vm226 = vcmp.eq.f32.partialorder %v225, 8.507059e+37
    %v227 = vand.u32 %v215, 2147483648
    %v228 = vor.u32 1.1754944e-38, %v227
    %v229 = vsel %vm226, %v228, %v224
    %v230 = vsub.f32 %v170, 1.0
    %v231 = vsub.f32 %v172, 1.0
    %v232 = vsub.f32 %v174, 1.0
    %v233 = vsub.f32 %v176, 1.0
    %v234 = vsub.f32 %v178, 1.0
    %v235 = vsub.f32 %v180, 1.0
    %v236 = vsub.f32 %v182, 1.0
    %v237 = vsub.f32 %v184, 1.0
    %v238 = vsub.f32 %v186, 1.0
    %v239 = vsub.f32 %v188, 1.0
    %v240 = vsub.f32 %v190, 1.0
    %v241 = vsub.f32 %v192, 1.0
    %v242 = vsub.f32 %v194, 1.0
    %v243 = vsub.f32 %v196, 1.0
    %v244 = vsub.f32 %v198, 1.0
    %v245 = vsub.f32 %v200, 1.0
    %v246 = vmul.f32 %v230, %v229
    %v247 = vmul.f32 %v231, %v229
    %v248 = vmul.f32 %v232, %v229
    %v249 = vmul.f32 %v233, %v229
    %v250 = vmul.f32 %v234, %v229
    %v251 = vmul.f32 %v235, %v229
    %v252 = vmul.f32 %v236, %v229
    %v253 = vmul.f32 %v237, %v229
    %v254 = vmul.f32 %v238, %v229
    %v255 = vmul.f32 %v239, %v229
    %v256 = vmul.f32 %v240, %v229
    %v257 = vmul.f32 %v241, %v229
    %v258 = vmul.f32 %v242, %v229
    %v259 = vmul.f32 %v243, %v229
    %v260 = vmul.f32 %v244, %v229
    %v261 = vmul.f32 %v245, %v229
    %v262 = vmul.f32 %v246, 1.442695
    %v263 = vpow.pop %v262
    %v264 = vmul.f32 %v247, 1.442695
    %v265 = vpow.pop %v264
    %v266 = vmul.f32 %v248, 1.442695
    %v267 = vpow.pop %v266
    %v268 = vmul.f32 %v249, 1.442695
    %v269 = vpow.pop %v268
    %v270 = vmul.f32 %v250, 1.442695
    %v271 = vpow.pop %v270
    %v272 = vmul.f32 %v251, 1.442695
    %v273 = vpow.pop %v272
    %v274 = vmul.f32 %v252, 1.442695
    %v275 = vpow.pop %v274
    %v276 = vmul.f32 %v253, 1.442695
    %v277 = vpow.pop %v276
    %v278 = vmul.f32 %v254, 1.442695
    %v279 = vpow.pop %v278
    %v280 = vmul.f32 %v255, 1.442695
    %v281 = vpow.pop %v280
    %v282 = vmul.f32 %v256, 1.442695
    %v283 = vpow.pop %v282
    %v284 = vmul.f32 %v257, 1.442695
    %v285 = vpow.pop %v284
    %v286 = vmul.f32 %v258, 1.442695
    %v287 = vpow.pop %v286
    %v288 = vmul.f32 %v259, 1.442695
    %v289 = vpow.pop %v288
    %v290 = vmul.f32 %v260, 1.442695
    %v291 = vpow.pop %v290
    %v292 = vmul.f32 %v261, 1.442695
    %v293 = vpow.pop %v292
    %v294 = vadd.f32 %v263, %v265
    %v295 = vadd.f32 %v294, %v267
    %v296 = vadd.f32 %v295, %v269
    %v297 = vadd.f32 %v296, %v271
    %v298 = vadd.f32 %v297, %v273
    %v299 = vadd.f32 %v298, %v275
    %v300 = vadd.f32 %v299, %v277
    %v301 = vadd.f32 %v300, %v279
    %v302 = vadd.f32 %v301, %v281
    %v303 = vadd.f32 %v302, %v283
    %v304 = vadd.f32 %v303, %v285
    %v305 = vadd.f32 %v304, %v287
    %v306 = vadd.f32 %v305, %v289
    %v307 = vadd.f32 %v306, %v291
    %v308 = vadd.f32 %v307, %v293
    %v309 = vlog2.pop %v308
    %v310 = vmul.f32 %v309, 0.6931472
    %v311 = vsel %vm152, %v136, 4294967295
    %312 = vst [vmem:[#allocation5] sm:$0xff] %v311
    %v313 = vsel %vm152, %v310, 0.0
    %v314 = vadd.f32 %v313, 0.0
    %315 = vst [vmem:[#allocation6] sm:$0xff] %v314
    %v316 = vsel %vm152, 1, 0
    %v317 = vcvt.s32.f32 %v316
    %v318 = vadd.f32 %v317, 0.0
    %319 = vst [vmem:[#allocation8] sm:$0xff] %v318
    // Predicated region
    $region10: #{tpu_custom_call.1} parent=1 // pred_check
      _
    $region11: #{tpu_custom_call.1} parent=1 // pred_check_branch
      %321 = sbr.rel (0) target = $region13
    $region12: #{tpu_custom_call.1} parent=1 // pred_region
      %323 = vsyncadd [#allocation4], 0
      %s325 = sshll.u32 [#allocation5], 4
      %s326 = int_to_ptr.vmem [resolvable:$true] %s325
      %s327 = sshll.u32 %s1, 4
      %s328 = int_to_ptr.hbm [resolvable:$true] %s327
      %330 = dma.vmem_to_hbm [thread:$0]  %s326, 128, %s328, [#allocation4]
    $region13: #{tpu_custom_call.1} parent=1 // pred_fallthru
      _
    // Predicated region
    $region14: #{tpu_custom_call.1} parent=1 // pred_check
      _
    $region15: #{tpu_custom_call.1} parent=1 // pred_check_branch
      %332 = sbr.rel (0) target = $region17
    $region16: #{tpu_custom_call.1} parent=1 // pred_region
      %334 = vsyncadd [#allocation7], 0
      %s336 = sshll.u32 [#allocation6], 4
      %s337 = int_to_ptr.vmem [resolvable:$true] %s336
      %s338 = sshll.u32 %s2, 4
      %s339 = int_to_ptr.hbm [resolvable:$true] %s338
      %341 = dma.vmem_to_hbm [thread:$0]  %s337, 128, %s339, [#allocation7]
    $region17: #{tpu_custom_call.1} parent=1 // pred_fallthru
      _
    // Predicated region
    $region18: #{tpu_custom_call.1} parent=1 // pred_check
      _
    $region19: #{tpu_custom_call.1} parent=1 // pred_check_branch
      %343 = sbr.rel (0) target = $region21
    $region20: #{tpu_custom_call.1} parent=1 // pred_region
      %345 = vsyncadd [#allocation7], 0
      %s347 = sshll.u32 [#allocation8], 4
      %s348 = int_to_ptr.vmem [resolvable:$true] %s347
      %s349 = sshll.u32 %s3, 4
      %s350 = int_to_ptr.hbm [resolvable:$true] %s349
      %352 = dma.vmem_to_hbm [thread:$0]  %s348, 128, %s350, [#allocation7]
    $region21: #{tpu_custom_call.1} parent=1 // pred_fallthru
      _
    // Predicated region
    $region22: #{tpu_custom_call.1} parent=1 // pred_check
      _
    $region23: #{tpu_custom_call.1} parent=1 // pred_check_branch
      %354 = sbr.rel (0) target = $region25
    $region24: #{tpu_custom_call.1} parent=1 // pred_region
      %356 = dma.done [#allocation4], 128
    $region25: #{tpu_custom_call.1} parent=1 // pred_fallthru
      _
    // Predicated region
    $region26: #{tpu_custom_call.1} parent=1 // pred_check
      _
    $region27: #{tpu_custom_call.1} parent=1 // pred_check_branch
      %358 = sbr.rel (0) target = $region29
    $region28: #{tpu_custom_call.1} parent=1 // pred_region
      %360 = dma.done [#allocation7], 128
    $region29: #{tpu_custom_call.1} parent=1 // pred_fallthru
      _
    // Predicated region
    $region30: #{tpu_custom_call.1} parent=1 // pred_check
      _
    $region31: #{tpu_custom_call.1} parent=1 // pred_check_branch
      %362 = sbr.rel (0) target = $region33
    $region32: #{tpu_custom_call.1} parent=1 // pred_region
      %364 = dma.done [#allocation7], 128
    $region33: #{tpu_custom_call.1} parent=1 // pred_fallthru
      _
    %365 = vsyncpa [#allocation3], 1
    %366 = vsyncpa [#allocation4], 1
    %367 = vsyncpa [#allocation7], 1

</llo_original>
